<compile_context>
chip_gen: v7x
topology: tpu7x:2x2x1
jax: 0.10.0
libtpu: 0.0.40
codegen_flags: <defaults>
</compile_context>

<pallas_src>
import functools

import numpy as np
import jax
import jax.numpy as jnp
from jax.scipy.special import gammaln
from jax.experimental import pallas as pl
from jax.experimental.pallas import tpu as pltpu


# ----------------------- Lanczos log-gamma as a single rational -----------------------
#
# ser(z) = 1.000000000190015 + sum_j c_j / (z + 1 + j)   (j = 0..5)
#        = P(z) / Q(z)
# lgamma(z) = (z+0.5)*log(z+5.5) - (z+5.5) + log( sqrt(2*pi) * P(z) / (z*Q(z)) )
#
# P and z*Q coefficients are built once in float64 at import time; in-kernel
# evaluation is Horner (mul/add on the VALU) + one divide + two logs on the EUP.

def _build_lanczos_rational():
    coefs = [76.18009172947146, -86.50532032941677, 24.01409824083091,
             -1.231739572450155, 0.1208650973866179e-2, -0.5395239384953e-5]
    q = np.poly1d([1.0])
    for j in range(6):
        q = q * np.poly1d([1.0, 1.0 + j])          # Q(z) = prod_j (z + 1 + j)
    p = 1.000000000190015 * q
    for j, c in enumerate(coefs):
        pj = np.poly1d([1.0])
        for k in range(6):
            if k != j:
                pj = pj * np.poly1d([1.0, 1.0 + k])
        p = p + c * pj                             # + c_j * Q(z)/(z+1+j)
    zq = q * np.poly1d([1.0, 0.0])                 # z * Q(z)  (folds the final /z)
    return (tuple(float(v) for v in p.coefficients),
            tuple(float(v) for v in zq.coefficients))


_LANCZOS_P_COEFS, _LANCZOS_ZQ_COEFS = _build_lanczos_rational()
_SQRT_2PI = 2.5066282746310005


def _polyval(z, coefs):
    acc = jnp.full_like(z, coefs[0])
    for c in coefs[1:]:
        acc = acc * z + c
    return acc


def _lgamma(z):
    # Valid for z > 0 (r is strictly positive, x >= 0).
    t = z + 5.5
    p = _polyval(z, _LANCZOS_P_COEFS)
    zq = _polyval(z, _LANCZOS_ZQ_COEFS)
    return (z + 0.5) * jnp.log(t) - t + jnp.log(_SQRT_2PI * p / zq)


def _logsigmoid(x):
    # Numerically stable log(sigmoid(x)) = min(x, 0) - log(1 + exp(-|x|)).
    return jnp.minimum(x, 0.0) - jnp.log(1.0 + jnp.exp(-jnp.abs(x)))


# ----------------------------------- kernel ----------------------------------------


def st_nb_kernel(vsel_ref, rhat_ref, x_ref, o_ref, out_ref):
    vsel = vsel_ref[...]     # (S, Z)        v[:, gidx]^T   (spots on sublane)
    rhat_t = rhat_ref[...]   # (Z, tg)       Rhat^T gene tile (genes on lane)
    x = x_ref[...]           # (S, tg)       counts (spots x genes)
    o = o_ref[...]           # (1, tg)       per-gene logits row

    # r[s, g] = sum_z v[z, gidx[s]] * Rhat[g, z]   == (Rhat @ v[:, gidx]).T  — MXU.
    r = jnp.dot(vsel, rhat_t, preferred_element_type=jnp.float32)   # (S, tg)
    r = jnp.maximum(r, 1e-30)   # guard for lgamma(z > 0)

    # Per-gene rows; implicit broadcast over the 8/16 sublane spot axis is cheap.
    ls_pos = _logsigmoid(o)
    ls_neg = _logsigmoid(-o)

    lup = r * ls_neg + x * ls_pos
    # NB log-normalization WITHOUT the x-only lgamma(1+x) term (hoisted to wrapper):
    #   contrib = lup - (-lgamma(r+x) + lgamma(r)) = lup + lgamma(r+x) - lgamma(r)
    contrib = lup + _lgamma(r + x) - _lgamma(r)

    # Reduce over spots (sublane axis) only; the lane-dense (1, tg) partial row is
    # written out and the tiny gene-axis sum happens in JAX (keeps the grid parallel).
    out_ref[...] = jnp.sum(contrib, axis=0, keepdims=True)


# ----------------------------------- wrapper ----------------------------------------


@functools.partial(jax.jit, static_argnames=("tile_g",))
def st_model_forward(x, gidx, R, logits, eta, theta, beta, *, tile_g=None):
    """Pallas implementation of STModel.forward. Returns the scalar loss."""
    G, K = R.shape
    Z = K + 1
    S = gidx.shape[0]

    if tile_g is None:
        tile_g = next((t for t in (512, 256, 128) if G % t == 0), G)
    assert G % tile_g == 0

    # --- tiny parameter-transform glue kept in XLA (Z = K+1 is ~8; negligible HBM) ---
    # TODO(synk): for very large G the softplus/concat transforms could be fused
    # into the kernel; they are left here as (G x 8)/(8 x S) glue.
    v_sel_t = jax.nn.softplus(theta[:, gidx]).T                         # (S, Z)
    rhat_t = jnp.concatenate(
        [jax.nn.softplus(beta) * R, jax.nn.softplus(eta)], axis=1).T    # (Z, G)
    x = x.astype(jnp.float32)                                           # (S, G)
    o_row = logits.reshape(1, G).astype(jnp.float32)                    # (1, G)

    grid = (G // tile_g,)
    partial = pl.pallas_call(
        st_nb_kernel,
        out_shape=jax.ShapeDtypeStruct((1, G), jnp.float32),
        grid_spec=pltpu.PrefetchScalarGridSpec(
            num_scalar_prefetch=0,
            grid=grid,
            in_specs=[
                pl.BlockSpec((S, Z), lambda i: (0, 0)),        # v[:, gidx]^T (resident)
                pl.BlockSpec((Z, tile_g), lambda i: (0, i)),   # Rhat^T gene tile
                pl.BlockSpec((S, tile_g), lambda i: (0, i)),   # counts tile
                pl.BlockSpec((1, tile_g), lambda i: (0, i)),   # logits row
            ],
            out_specs=pl.BlockSpec((1, tile_g), lambda i: (0, i)),  # lane-dense partials
        ),
        compiler_params=pltpu.CompilerParams(
            dimension_semantics=("parallel",),   # independent gene tiles (v7x: 2 TCs)
        ),
    )(v_sel_t, rhat_t, x, o_row)

    # x-only and eta-only terms hoisted out of the kernel (parameter-independent /
    # trivial reductions): ll = sum(partial) - sum(lgamma(1+x)).
    sum_lgamma_1px = jnp.sum(gammaln(1.0 + x))
    noise = 0.5 * jnp.sum(eta * eta)
    return -jnp.sum(partial) + sum_lgamma_1px + noise


# ------------------------------- pure-JAX reference ---------------------------------


def st_model_forward_ref(x, gidx, R, logits, eta, theta, beta):
    v = jax.nn.softplus(theta)
    eps = jax.nn.softplus(eta)
    rhat = jnp.concatenate([jax.nn.softplus(beta) * R, eps], axis=1)
    r = rhat @ v[:, gidx]
    xt = x.T
    lup = r * jax.nn.log_sigmoid(-logits) + xt * jax.nn.log_sigmoid(logits)
    lnorm = -gammaln(r + xt) + gammaln(1.0 + xt) + gammaln(r)
    ll = jnp.sum(lup - lnorm)
    noise = -0.5 * jnp.sum(eta**2)
    return -ll - noise


# -------------------------------------- main ----------------------------------------

if __name__ == "__main__":
    # Small shapes implied by the module:
    #   G genes, K cell types (Z = K + 1), S_total spots, batch of S selected spots.
    G, K = 256, 7
    Z = K + 1
    S_TOTAL = 32
    S = 16

    key = jax.random.PRNGKey(0)
    k_r, k_o, k_eta, k_theta, k_beta, k_gidx, k_x = jax.random.split(key, 7)

    # "Module init" (deterministic synthetic parameters, matching __init__ shapes).
    R = jax.random.uniform(k_r, (G, K), jnp.float32, minval=0.1, maxval=2.0)
    logits = 0.5 * jax.random.normal(k_o, (G, 1), jnp.float32)          # self.o
    eta = jax.random.normal(k_eta, (G, 1), jnp.float32)                 # N(0, 1)
    theta = jax.random.normal(k_theta, (Z, S_TOTAL), jnp.float32)       # N(0, 1)
    beta = 0.1 * jax.random.normal(k_beta, (G, 1), jnp.float32)         # N(0, 0.1)

    # Forward inputs: counts x (spots x genes) and spot indices gidx.
    gidx = jax.random.randint(k_gidx, (S,), 0, S_TOTAL, dtype=jnp.int32)
    x = jax.random.poisson(k_x, 3.0, (S, G)).astype(jnp.float32)

    loss = st_model_forward(x, gidx, R, logits, eta, theta, beta)
    loss = jax.block_until_ready(loss)

    loss_ref = st_model_forward_ref(x, gidx, R, logits, eta, theta, beta)
    loss_ref = jax.block_until_ready(loss_ref)

    if jnp.allclose(loss, loss_ref, rtol=2e-3, atol=2.0):
        print("KERNEL_OK")
    else:
        raise SystemExit(f"mismatch: pallas={float(loss)} ref={float(loss_ref)}")
</pallas_src>

<mosaic_0001>
module attributes {stable_mosaic.version = 11 : i64} {
  func.func @st_nb_kernel(%arg0: i32, %arg1: memref<16x8xf32, #tpu.memory_space<vmem>>, %arg2: memref<8x256xf32, #tpu.memory_space<vmem>>, %arg3: memref<16x256xf32, #tpu.memory_space<vmem>>, %arg4: memref<1x256xf32, #tpu.memory_space<vmem>>, %arg5: memref<1x256xf32, #tpu.memory_space<vmem>>) attributes {dimension_semantics = [#tpu.dimension_semantics<parallel>], iteration_bounds = array<i64: 1>, scalar_prefetch = 0 : i64, scratch_operands = 0 : i64, tpu.core_type = #tpu.core_type<tc>, window_params = [{pipeline_mode = #tpu.pipeline_mode<synchronous>, transform_indices = @transform_0, window_bounds = array<i64: 16, 8>}, {transform_indices = @transform_1, window_bounds = array<i64: 8, 256>}, {transform_indices = @transform_2, window_bounds = array<i64: 16, 256>}, {transform_indices = @transform_3, window_bounds = array<i64: 1, 256>}, {transform_indices = @transform_4, window_bounds = array<i64: 1, 256>}]} {
    %c0 = arith.constant 0 : index
    %c0_0 = arith.constant 0 : index
    %0 = vector.load %arg1[%c0, %c0_0] : memref<16x8xf32, #tpu.memory_space<vmem>>, vector<16x8xf32>
    %c0_1 = arith.constant 0 : index
    %c0_2 = arith.constant 0 : index
    %1 = vector.load %arg2[%c0_1, %c0_2] : memref<8x256xf32, #tpu.memory_space<vmem>>, vector<8x256xf32>
    %c0_3 = arith.constant 0 : index
    %c0_4 = arith.constant 0 : index
    %2 = vector.load %arg3[%c0_3, %c0_4] : memref<16x256xf32, #tpu.memory_space<vmem>>, vector<16x256xf32>
    %c0_5 = arith.constant 0 : index
    %c0_6 = arith.constant 0 : index
    %3 = vector.load %arg4[%c0_5, %c0_6] : memref<1x256xf32, #tpu.memory_space<vmem>>, vector<1x256xf32>
    %cst = arith.constant dense<0.000000e+00> : vector<16x256xf32>
    %4 = tpu.matmul %0, %1, %cst {dimension_numbers = #tpu.dot_dimension_numbers<[1], [0], [0], [1], [0, 0, 1, 1], [], []>} : vector<16x8xf32>, vector<8x256xf32>, vector<16x256xf32> -> vector<16x256xf32>
    %cst_7 = arith.constant 1.000000e-30 : f32
    %5 = vector.broadcast %cst_7 : f32 to vector<16x256xf32>
    %6 = arith.maximumf %4, %5 : vector<16x256xf32>
    %cst_8 = arith.constant 0.000000e+00 : f32
    %7 = vector.broadcast %cst_8 : f32 to vector<1x256xf32>
    %8 = arith.minimumf %3, %7 : vector<1x256xf32>
    %9 = math.absf %3 : vector<1x256xf32>
    %cst_9 = arith.constant 0.000000e+00 : f32
    %10 = vector.broadcast %cst_9 : f32 to vector<1x256xf32>
    %11 = arith.subf %10, %9 : vector<1x256xf32>
    %12 = math.exp %11 : vector<1x256xf32>
    %cst_10 = arith.constant 1.000000e+00 : f32
    %13 = vector.broadcast %cst_10 : f32 to vector<1x256xf32>
    %14 = arith.addf %13, %12 : vector<1x256xf32>
    %15 = math.log %14 : vector<1x256xf32>
    %16 = arith.subf %8, %15 : vector<1x256xf32>
    %cst_11 = arith.constant 0.000000e+00 : f32
    %17 = vector.broadcast %cst_11 : f32 to vector<1x256xf32>
    %18 = arith.subf %17, %3 : vector<1x256xf32>
    %cst_12 = arith.constant 0.000000e+00 : f32
    %19 = vector.broadcast %cst_12 : f32 to vector<1x256xf32>
    %20 = arith.minimumf %18, %19 : vector<1x256xf32>
    %21 = math.absf %18 : vector<1x256xf32>
    %cst_13 = arith.constant 0.000000e+00 : f32
    %22 = vector.broadcast %cst_13 : f32 to vector<1x256xf32>
    %23 = arith.subf %22, %21 : vector<1x256xf32>
    %24 = math.exp %23 : vector<1x256xf32>
    %cst_14 = arith.constant 1.000000e+00 : f32
    %25 = vector.broadcast %cst_14 : f32 to vector<1x256xf32>
    %26 = arith.addf %25, %24 : vector<1x256xf32>
    %27 = math.log %26 : vector<1x256xf32>
    %28 = arith.subf %20, %27 : vector<1x256xf32>
    %29 = vector.broadcast %28 : vector<1x256xf32> to vector<16x256xf32>
    %30 = arith.mulf %6, %29 : vector<16x256xf32>
    %31 = vector.broadcast %16 : vector<1x256xf32> to vector<16x256xf32>
    %32 = arith.mulf %2, %31 : vector<16x256xf32>
    %33 = arith.addf %30, %32 : vector<16x256xf32>
    %34 = arith.addf %6, %2 : vector<16x256xf32>
    %cst_15 = arith.constant 5.500000e+00 : f32
    %35 = vector.broadcast %cst_15 : f32 to vector<16x256xf32>
    %36 = arith.addf %34, %35 : vector<16x256xf32>
    %cst_16 = arith.constant 1.000000e+00 : f32
    %37 = vector.broadcast %cst_16 : f32 to vector<16x256xf32>
    %38 = arith.mulf %37, %34 : vector<16x256xf32>
    %cst_17 = arith.constant 33.4583321 : f32
    %39 = vector.broadcast %cst_17 : f32 to vector<16x256xf32>
    %40 = arith.addf %38, %39 : vector<16x256xf32>
    %41 = arith.mulf %40, %34 : vector<16x256xf32>
    %cst_18 = arith.constant 466.334198 : f32
    %42 = vector.broadcast %cst_18 : f32 to vector<16x256xf32>
    %43 = arith.addf %41, %42 : vector<16x256xf32>
    %44 = arith.mulf %43, %34 : vector<16x256xf32>
    %cst_19 = arith.constant 3465.70947 : f32
    %45 = vector.broadcast %cst_19 : f32 to vector<16x256xf32>
    %46 = arith.addf %44, %45 : vector<16x256xf32>
    %47 = arith.mulf %46, %34 : vector<16x256xf32>
    %cst_20 = arith.constant 14484.9141 : f32
    %48 = vector.broadcast %cst_20 : f32 to vector<16x256xf32>
    %49 = arith.addf %47, %48 : vector<16x256xf32>
    %50 = arith.mulf %49, %34 : vector<16x256xf32>
    %cst_21 = arith.constant 32281.0645 : f32
    %51 = vector.broadcast %cst_21 : f32 to vector<16x256xf32>
    %52 = arith.addf %50, %51 : vector<16x256xf32>
    %53 = arith.mulf %52, %34 : vector<16x256xf32>
    %cst_22 = arith.constant 29969.5938 : f32
    %54 = vector.broadcast %cst_22 : f32 to vector<16x256xf32>
    %55 = arith.addf %53, %54 : vector<16x256xf32>
    %cst_23 = arith.constant 1.000000e+00 : f32
    %56 = vector.broadcast %cst_23 : f32 to vector<16x256xf32>
    %57 = arith.mulf %56, %34 : vector<16x256xf32>
    %cst_24 = arith.constant 2.100000e+01 : f32
    %58 = vector.broadcast %cst_24 : f32 to vector<16x256xf32>
    %59 = arith.addf %57, %58 : vector<16x256xf32>
    %60 = arith.mulf %59, %34 : vector<16x256xf32>
    %cst_25 = arith.constant 1.750000e+02 : f32
    %61 = vector.broadcast %cst_25 : f32 to vector<16x256xf32>
    %62 = arith.addf %60, %61 : vector<16x256xf32>
    %63 = arith.mulf %62, %34 : vector<16x256xf32>
    %cst_26 = arith.constant 7.350000e+02 : f32
    %64 = vector.broadcast %cst_26 : f32 to vector<16x256xf32>
    %65 = arith.addf %63, %64 : vector<16x256xf32>
    %66 = arith.mulf %65, %34 : vector<16x256xf32>
    %cst_27 = arith.constant 1.624000e+03 : f32
    %67 = vector.broadcast %cst_27 : f32 to vector<16x256xf32>
    %68 = arith.addf %66, %67 : vector<16x256xf32>
    %69 = arith.mulf %68, %34 : vector<16x256xf32>
    %cst_28 = arith.constant 1.764000e+03 : f32
    %70 = vector.broadcast %cst_28 : f32 to vector<16x256xf32>
    %71 = arith.addf %69, %70 : vector<16x256xf32>
    %72 = arith.mulf %71, %34 : vector<16x256xf32>
    %cst_29 = arith.constant 7.200000e+02 : f32
    %73 = vector.broadcast %cst_29 : f32 to vector<16x256xf32>
    %74 = arith.addf %72, %73 : vector<16x256xf32>
    %75 = arith.mulf %74, %34 : vector<16x256xf32>
    %cst_30 = arith.constant 0.000000e+00 : f32
    %76 = vector.broadcast %cst_30 : f32 to vector<16x256xf32>
    %77 = arith.addf %75, %76 : vector<16x256xf32>
    %cst_31 = arith.constant 5.000000e-01 : f32
    %78 = vector.broadcast %cst_31 : f32 to vector<16x256xf32>
    %79 = arith.addf %34, %78 : vector<16x256xf32>
    %80 = math.log %36 : vector<16x256xf32>
    %81 = arith.mulf %79, %80 : vector<16x256xf32>
    %82 = arith.subf %81, %36 : vector<16x256xf32>
    %cst_32 = arith.constant 2.50662827 : f32
    %83 = vector.broadcast %cst_32 : f32 to vector<16x256xf32>
    %84 = arith.mulf %83, %55 : vector<16x256xf32>
    %85 = arith.divf %84, %77 : vector<16x256xf32>
    %86 = math.log %85 : vector<16x256xf32>
    %87 = arith.addf %82, %86 : vector<16x256xf32>
    %88 = arith.addf %33, %87 : vector<16x256xf32>
    %cst_33 = arith.constant 5.500000e+00 : f32
    %89 = vector.broadcast %cst_33 : f32 to vector<16x256xf32>
    %90 = arith.addf %6, %89 : vector<16x256xf32>
    %cst_34 = arith.constant 1.000000e+00 : f32
    %91 = vector.broadcast %cst_34 : f32 to vector<16x256xf32>
    %92 = arith.mulf %91, %6 : vector<16x256xf32>
    %cst_35 = arith.constant 33.4583321 : f32
    %93 = vector.broadcast %cst_35 : f32 to vector<16x256xf32>
    %94 = arith.addf %92, %93 : vector<16x256xf32>
    %95 = arith.mulf %94, %6 : vector<16x256xf32>
    %cst_36 = arith.constant 466.334198 : f32
    %96 = vector.broadcast %cst_36 : f32 to vector<16x256xf32>
    %97 = arith.addf %95, %96 : vector<16x256xf32>
    %98 = arith.mulf %97, %6 : vector<16x256xf32>
    %cst_37 = arith.constant 3465.70947 : f32
    %99 = vector.broadcast %cst_37 : f32 to vector<16x256xf32>
    %100 = arith.addf %98, %99 : vector<16x256xf32>
    %101 = arith.mulf %100, %6 : vector<16x256xf32>
    %cst_38 = arith.constant 14484.9141 : f32
    %102 = vector.broadcast %cst_38 : f32 to vector<16x256xf32>
    %103 = arith.addf %101, %102 : vector<16x256xf32>
    %104 = arith.mulf %103, %6 : vector<16x256xf32>
    %cst_39 = arith.constant 32281.0645 : f32
    %105 = vector.broadcast %cst_39 : f32 to vector<16x256xf32>
    %106 = arith.addf %104, %105 : vector<16x256xf32>
    %107 = arith.mulf %106, %6 : vector<16x256xf32>
    %cst_40 = arith.constant 29969.5938 : f32
    %108 = vector.broadcast %cst_40 : f32 to vector<16x256xf32>
    %109 = arith.addf %107, %108 : vector<16x256xf32>
    %cst_41 = arith.constant 1.000000e+00 : f32
    %110 = vector.broadcast %cst_41 : f32 to vector<16x256xf32>
    %111 = arith.mulf %110, %6 : vector<16x256xf32>
    %cst_42 = arith.constant 2.100000e+01 : f32
    %112 = vector.broadcast %cst_42 : f32 to vector<16x256xf32>
    %113 = arith.addf %111, %112 : vector<16x256xf32>
    %114 = arith.mulf %113, %6 : vector<16x256xf32>
    %cst_43 = arith.constant 1.750000e+02 : f32
    %115 = vector.broadcast %cst_43 : f32 to vector<16x256xf32>
    %116 = arith.addf %114, %115 : vector<16x256xf32>
    %117 = arith.mulf %116, %6 : vector<16x256xf32>
    %cst_44 = arith.constant 7.350000e+02 : f32
    %118 = vector.broadcast %cst_44 : f32 to vector<16x256xf32>
    %119 = arith.addf %117, %118 : vector<16x256xf32>
    %120 = arith.mulf %119, %6 : vector<16x256xf32>
    %cst_45 = arith.constant 1.624000e+03 : f32
    %121 = vector.broadcast %cst_45 : f32 to vector<16x256xf32>
    %122 = arith.addf %120, %121 : vector<16x256xf32>
    %123 = arith.mulf %122, %6 : vector<16x256xf32>
    %cst_46 = arith.constant 1.764000e+03 : f32
    %124 = vector.broadcast %cst_46 : f32 to vector<16x256xf32>
    %125 = arith.addf %123, %124 : vector<16x256xf32>
    %126 = arith.mulf %125, %6 : vector<16x256xf32>
    %cst_47 = arith.constant 7.200000e+02 : f32
    %127 = vector.broadcast %cst_47 : f32 to vector<16x256xf32>
    %128 = arith.addf %126, %127 : vector<16x256xf32>
    %129 = arith.mulf %128, %6 : vector<16x256xf32>
    %cst_48 = arith.constant 0.000000e+00 : f32
    %130 = vector.broadcast %cst_48 : f32 to vector<16x256xf32>
    %131 = arith.addf %129, %130 : vector<16x256xf32>
    %cst_49 = arith.constant 5.000000e-01 : f32
    %132 = vector.broadcast %cst_49 : f32 to vector<16x256xf32>
    %133 = arith.addf %6, %132 : vector<16x256xf32>
    %134 = math.log %90 : vector<16x256xf32>
    %135 = arith.mulf %133, %134 : vector<16x256xf32>
    %136 = arith.subf %135, %90 : vector<16x256xf32>
    %cst_50 = arith.constant 2.50662827 : f32
    %137 = vector.broadcast %cst_50 : f32 to vector<16x256xf32>
    %138 = arith.mulf %137, %109 : vector<16x256xf32>
    %139 = arith.divf %138, %131 : vector<16x256xf32>
    %140 = math.log %139 : vector<16x256xf32>
    %141 = arith.addf %136, %140 : vector<16x256xf32>
    %142 = arith.subf %88, %141 : vector<16x256xf32>
    %cst_51 = arith.constant dense<0.000000e+00> : vector<256xf32>
    %143 = vector.multi_reduction <add>, %142, %cst_51 [0] : vector<16x256xf32> to vector<256xf32>
    %144 = vector.shape_cast %143 : vector<256xf32> to vector<1x256xf32>
    %c0_52 = arith.constant 0 : index
    %c0_53 = arith.constant 0 : index
    %145 = vector.load %arg5[%c0_52, %c0_53] : memref<1x256xf32, #tpu.memory_space<vmem>>, vector<1x256xf32>
    tpu.vector_store %arg5[%c0_52, %c0_53], %144 {strides = array<i32>} : memref<1x256xf32, #tpu.memory_space<vmem>>, vector<1x256xf32>,
    return
  }
  func.func @transform_0(%arg0: i32) -> (i32, i32) {
    %c0_i32 = arith.constant 0 : i32
    %c0_i32_0 = arith.constant 0 : i32
    %c0_i32_1 = arith.constant 0 : i32
    return %c0_i32, %c0_i32_0 : i32, i32
  }
  func.func @transform_1(%arg0: i32) -> (i32, i32) {
    %c0_i32 = arith.constant 0 : i32
    %c0_i32_0 = arith.constant 0 : i32
    return %c0_i32, %arg0 : i32, i32
  }
  func.func @transform_2(%arg0: i32) -> (i32, i32) {
    %c0_i32 = arith.constant 0 : i32
    %c0_i32_0 = arith.constant 0 : i32
    return %c0_i32, %arg0 : i32, i32
  }
  func.func @transform_3(%arg0: i32) -> (i32, i32) {
    %c0_i32 = arith.constant 0 : i32
    %c0_i32_0 = arith.constant 0 : i32
    return %c0_i32, %arg0 : i32, i32
  }
  func.func @transform_4(%arg0: i32) -> (i32, i32) {
    %c0_i32 = arith.constant 0 : i32
    %c0_i32_0 = arith.constant 0 : i32
    return %c0_i32, %arg0 : i32, i32
  }
}

</mosaic_0001>

<llo_original>
// kernel: st_model_forward.1
$region0: #{st_model_forward.1}
  #allocation0 [shape = 'u32[]', space=smem, size = 0x4, offset = 0x4, fixed_abs, tag = 'smem constant byte address 0x4 - core index']
  #allocation1 [shape = 'u32[144,128]{1,0:T(1,128)}', space=vmem, size = 0x12000, scoped, tag = 'internal scratch']
  %s0 = inlined_call_operand.vmem [shape: f32[16,8], index: 0, kind: input, shape index: {}]
  %s1 = inlined_call_operand.vmem [shape: f32[8,256], index: 1, kind: input, shape index: {}]
  %s2 = inlined_call_operand.vmem [shape: f32[16,256], index: 2, kind: input, shape index: {}]
  %s3 = inlined_call_operand.vmem [shape: f32[1,256], index: 3, kind: input, shape index: {}]
  %s4 = inlined_call_operand.vmem [shape: f32[1,256], index: 4, kind: output, shape index: {}]
  %s5 = sld [smem:[#allocation0]]
  $region26: #{st_model_forward.1} parent=0
    _
  %s7 = ssub.s32 1, %s5
  %s8 = scalar_select 0, %s7, %s5
  // Predicated region
  $region2: #{st_model_forward.1} parent=0 // pred_check
    _
  $region3: #{st_model_forward.1} parent=0 // pred_check_branch
    %10 = sbr.rel (0) target = $region5
  $region4: #{st_model_forward.1} parent=0 // pred_region
    _
  $region5: #{st_model_forward.1} parent=0 // pred_fallthru
    _
  // Predicated region
  $region6: #{st_model_forward.1} parent=0 // pred_check
    _
  $region7: #{st_model_forward.1} parent=0 // pred_check_branch
    %12 = sbr.rel (0) target = $region9
  $region8: #{st_model_forward.1} parent=0 // pred_region
    _
  $region9: #{st_model_forward.1} parent=0 // pred_fallthru
    _
  // Predicated region
  $region10: #{st_model_forward.1} parent=0 // pred_check
    _
  $region11: #{st_model_forward.1} parent=0 // pred_check_branch
    %14 = sbr.rel (0) target = $region13
  $region12: #{st_model_forward.1} parent=0 // pred_region
    _
  $region13: #{st_model_forward.1} parent=0 // pred_fallthru
    _
  // Predicated region
  $region14: #{st_model_forward.1} parent=0 // pred_check
    _
  $region15: #{st_model_forward.1} parent=0 // pred_check_branch
    %16 = sbr.rel (0) target = $region17
  $region16: #{st_model_forward.1} parent=0 // pred_region
    _
  $region17: #{st_model_forward.1} parent=0 // pred_fallthru
    _
  %v17 = vld [vmem:[%s0] sm:$0xff]
  %v18 = vld [vmem:[%s0 + $0x8] sm:$0xff]
  %v19 = vld [vmem:[%s1] sm:$0xff]
  %v20 = vld [vmem:[%s1 + $0x8] sm:$0xff]
  %v21 = vld [vmem:[%s2] sm:$0xff]
  %v22 = vld [vmem:[%s2 + $0x8] sm:$0xff]
  %v23 = vld [vmem:[%s2 + $0x10] sm:$0xff]
  %v24 = vld [vmem:[%s2 + $0x18] sm:$0xff]
  %v25 = vld [vmem:[%s3] sm:$0x3]
  %vm26 = vcmask 64512
  %v28 = vsel %vm26, %v17, 0
  %v31 = vsel %vm26, %v18, 0
  %33 = vmatprep.subr.mxu0 %v20
  %34 = vmatpush1.msra.mxu0 %v19
  %35 = vmatprep.subr.mxu0 0.0
  %36 = vmatpush1.msra.mxu0 0.0
  %37 = vmatprep.subr.mxu0 0.0
  %38 = vmatpush1.msra.mxu0 0.0
  %39 = vmatprep.subr.mxu0 0.0
  %40 = vmatpush1.msra.mxu0 0.0
  %41 = vmatprep.subr.mxu0 0.0
  %42 = vmatpush1.msra.mxu0 0.0
  %43 = vmatprep.subr.mxu0 0.0
  %44 = vmatpush1.msra.mxu0 0.0
  %45 = vmatprep.subr.mxu0 0.0
  %46 = vmatpush1.msra.mxu0 0.0
  %47 = vmatprep.subr.mxu0 0.0
  %48 = vmatpush1.msra.mxu0 0.0
  %49 = vmatprep.subr.mxu0 0.0
  %50 = vmatpush1.msra.mxu0 0.0
  %51 = vmatprep.subr.mxu0 0.0
  %52 = vmatpush1.msra.mxu0 0.0
  %53 = vmatprep.subr.mxu0 0.0
  %54 = vmatpush1.msra.mxu0 0.0
  %55 = vmatprep.subr.mxu0 0.0
  %56 = vmatpush1.msra.mxu0 0.0
  %57 = vmatprep.subr.mxu0 0.0
  %58 = vmatpush1.msra.mxu0 0.0
  %59 = vmatprep.subr.mxu0 0.0
  %60 = vmatpush1.msra.mxu0 0.0
  %61 = vmatprep.subr.mxu0 0.0
  %62 = vmatpush1.msra.mxu0 0.0
  %63 = vmatprep.subr.mxu0 0.0
  %64 = vmatpush1.msra.mxu0 0.0
  %65 = vmatprep.subr.mxu0 0.0
  %66 = vmatpush1.msra.mxu0 0.0
  %67 = vmatprep.subr.mxu0 0.0
  %68 = vmatpush1.msra.mxu0 0.0
  %69 = vmatprep.subr.mxu0 0.0
  %70 = vmatpush1.msra.mxu0 0.0
  %71 = vmatprep.subr.mxu0 0.0
  %72 = vmatpush1.msra.mxu0 0.0
  %73 = vmatprep.subr.mxu0 0.0
  %74 = vmatpush1.msra.mxu0 0.0
  %75 = vmatprep.subr.mxu0 0.0
  %76 = vmatpush1.msra.mxu0 0.0
  %77 = vmatprep.subr.mxu0 0.0
  %78 = vmatpush1.msra.mxu0 0.0
  %79 = vmatprep.subr.mxu0 0.0
  %80 = vmatpush1.msra.mxu0 0.0
  %81 = vmatprep.subr.mxu0 0.0
  %82 = vmatpush1.msra.mxu0 0.0
  %83 = vmatprep.subr.mxu0 0.0
  %84 = vmatpush1.msra.mxu0 0.0
  %85 = vmatprep.subr.mxu0 0.0
  %86 = vmatpush1.msra.mxu0 0.0
  %87 = vmatprep.subr.mxu0 0.0
  %88 = vmatpush1.msra.mxu0 0.0
  %89 = vmatprep.subr.mxu0 0.0
  %90 = vmatpush1.msra.mxu0 0.0
  %91 = vmatprep.subr.mxu0 0.0
  %92 = vmatpush1.msra.mxu0 0.0
  %93 = vmatprep.subr.mxu0 0.0
  %94 = vmatpush1.msra.mxu0 0.0
  %95 = vmatprep.subr.mxu0 0.0
  %96 = vmatpush1.msra.mxu0 0.0
  %97 = vmatprep.mubr.f32.mxu0 0.0
  %98 = vmatmul.mubr.f32.gmra.mrb[0].mxu0 %v28
  %v99 = vpop.f32.mrb[0].mxu0
  %v100 = vadd.f32 0.0, %v99
  %v101 = vpop.f32.mrb[0].mxu0
  %v102 = vadd.f32 0.0, %v101
  %103 = vmatprep.mubr.f32.mxu0 0.0
  %104 = vmatmul.mubr.f32.gmra.mrb[0].mxu0 %v31
  %v105 = vpop.f32.mrb[0].mxu0
  %v106 = vadd.f32 0.0, %v105
  %v107 = vpop.f32.mrb[0].mxu0
  %v108 = vadd.f32 0.0, %v107
  %109 = vdwg.mxu0
  %v110 = vmax.f32 %v100, 1e-30
  %v111 = vmax.f32 %v102, 1e-30
  %v112 = vmax.f32 %v106, 1e-30
  %v113 = vmax.f32 %v108, 1e-30
  %v114 = vmin.f32 %v25, 0.0
  %v115 = vand.u32 2147483647, %v25
  %v116 = vsub.f32 0.0, %v115
  %v117 = vmul.f32 %v116, 1.442695
  %v118 = vpow.pop %v117
  %v119 = vadd.f32 %v118, 1.0
  %v120 = vlog2.pop %v119
  %v121 = vmul.f32 %v120, 0.6931472
  %v122 = vsub.f32 %v114, %v121
  %v123 = vsub.f32 0.0, %v25
  %v124 = vmin.f32 %v123, 0.0
  %v125 = vand.u32 2147483647, %v123
  %v126 = vsub.f32 0.0, %v125
  %v127 = vmul.f32 %v126, 1.442695
  %v128 = vpow.pop %v127
  %v129 = vadd.f32 %v128, 1.0
  %v130 = vlog2.pop %v129
  %v131 = vmul.f32 %v130, 0.6931472
  %v132 = vsub.f32 %v124, %v131
  %v134 = vlaneseq
  %v135 = vshrl.u32 %v134, 7
  %v136 = vsub.s32 0, %v135
  %v137 = vrot.slane %v132, %v136
  %v138 = vlaneseq
  %v139 = vshrl.u32 %v138, 7
  %v140 = vsub.s32 1, %v139
  %v141 = vrot.slane %v132, %v140
  %v144 = vmul.f32 %v110, %v137
  %v145 = vmul.f32 %v111, %v141
  %v146 = vmul.f32 %v112, %v137
  %v147 = vmul.f32 %v113, %v141
  %v149 = vlaneseq
  %v150 = vshrl.u32 %v149, 7
  %v151 = vsub.s32 0, %v150
  %v152 = vrot.slane %v122, %v151
  %v153 = vlaneseq
  %v154 = vshrl.u32 %v153, 7
  %v155 = vsub.s32 1, %v154
  %v156 = vrot.slane %v122, %v155
  %v159 = vmul.f32 %v21, %v152
  %v160 = vmul.f32 %v22, %v156
  %v161 = vmul.f32 %v23, %v152
  %v162 = vmul.f32 %v24, %v156
  %v163 = vadd.f32 %v144, %v159
  %v164 = vadd.f32 %v145, %v160
  %v165 = vadd.f32 %v146, %v161
  %v166 = vadd.f32 %v147, %v162
  %v167 = vadd.f32 %v110, %v21
  %v168 = vadd.f32 %v111, %v22
  %v169 = vadd.f32 %v112, %v23
  %v170 = vadd.f32 %v113, %v24
  %v171 = vadd.f32 %v167, 5.5
  %v172 = vadd.f32 %v168, 5.5
  %v173 = vadd.f32 %v169, 5.5
  %v174 = vadd.f32 %v170, 5.5
  %v175 = vadd.f32 %v167, 33.458332
  %v176 = vadd.f32 %v168, 33.458332
  %v177 = vadd.f32 %v169, 33.458332
  %v178 = vadd.f32 %v170, 33.458332
  %v179 = vmul.f32 %v175, %v167
  %v180 = vmul.f32 %v176, %v168
  %v181 = vmul.f32 %v177, %v169
  %v182 = vmul.f32 %v178, %v170
  %v183 = vadd.f32 %v179, 466.3342
  %v184 = vadd.f32 %v180, 466.3342
  %v185 = vadd.f32 %v181, 466.3342
  %v186 = vadd.f32 %v182, 466.3342
  %v187 = vmul.f32 %v183, %v167
  %v188 = vmul.f32 %v184, %v168
  %v189 = vmul.f32 %v185, %v169
  %v190 = vmul.f32 %v186, %v170
  %v191 = vadd.f32 %v187, 3465.7095
  %v192 = vadd.f32 %v188, 3465.7095
  %v193 = vadd.f32 %v189, 3465.7095
  %v194 = vadd.f32 %v190, 3465.7095
  %v195 = vmul.f32 %v191, %v167
  %v196 = vmul.f32 %v192, %v168
  %v197 = vmul.f32 %v193, %v169
  %v198 = vmul.f32 %v194, %v170
  %v199 = vadd.f32 %v195, 14484.914
  %v200 = vadd.f32 %v196, 14484.914
  %v201 = vadd.f32 %v197, 14484.914
  %v202 = vadd.f32 %v198, 14484.914
  %v203 = vmul.f32 %v199, %v167
  %v204 = vmul.f32 %v200, %v168
  %v205 = vmul.f32 %v201, %v169
  %v206 = vmul.f32 %v202, %v170
  %v207 = vadd.f32 %v203, 32281.064
  %v208 = vadd.f32 %v204, 32281.064
  %v209 = vadd.f32 %v205, 32281.064
  %v210 = vadd.f32 %v206, 32281.064
  %v211 = vmul.f32 %v207, %v167
  %v212 = vmul.f32 %v208, %v168
  %v213 = vmul.f32 %v209, %v169
  %v214 = vmul.f32 %v210, %v170
  %v215 = vadd.f32 %v211, 29969.594
  %v216 = vadd.f32 %v212, 29969.594
  %v217 = vadd.f32 %v213, 29969.594
  %v218 = vadd.f32 %v214, 29969.594
  %v219 = vadd.f32 %v167, 21.0
  %v220 = vadd.f32 %v168, 21.0
  %v221 = vadd.f32 %v169, 21.0
  %v222 = vadd.f32 %v170, 21.0
  %v223 = vmul.f32 %v219, %v167
  %v224 = vmul.f32 %v220, %v168
  %v225 = vmul.f32 %v221, %v169
  %v226 = vmul.f32 %v222, %v170
  %v227 = vadd.f32 %v223, 175.0
  %v228 = vadd.f32 %v224, 175.0
  %v229 = vadd.f32 %v225, 175.0
  %v230 = vadd.f32 %v226, 175.0
  %v231 = vmul.f32 %v227, %v167
  %v232 = vmul.f32 %v228, %v168
  %v233 = vmul.f32 %v229, %v169
  %v234 = vmul.f32 %v230, %v170
  %v235 = vadd.f32 %v231, 735.0
  %v236 = vadd.f32 %v232, 735.0
  %v237 = vadd.f32 %v233, 735.0
  %v238 = vadd.f32 %v234, 735.0
  %v239 = vmul.f32 %v235, %v167
  %v240 = vmul.f32 %v236, %v168
  %v241 = vmul.f32 %v237, %v169
  %v242 = vmul.f32 %v238, %v170
  %v243 = vadd.f32 %v239, 1624.0
  %v244 = vadd.f32 %v240, 1624.0
  %v245 = vadd.f32 %v241, 1624.0
  %v246 = vadd.f32 %v242, 1624.0
  %v247 = vmul.f32 %v243, %v167
  %v248 = vmul.f32 %v244, %v168
  %v249 = vmul.f32 %v245, %v169
  %v250 = vmul.f32 %v246, %v170
  %v251 = vadd.f32 %v247, 1764.0
  %v252 = vadd.f32 %v248, 1764.0
  %v253 = vadd.f32 %v249, 1764.0
  %v254 = vadd.f32 %v250, 1764.0
  %v255 = vmul.f32 %v251, %v167
  %v256 = vmul.f32 %v252, %v168
  %v257 = vmul.f32 %v253, %v169
  %v258 = vmul.f32 %v254, %v170
  %v259 = vadd.f32 %v255, 720.0
  %v260 = vadd.f32 %v256, 720.0
  %v261 = vadd.f32 %v257, 720.0
  %v262 = vadd.f32 %v258, 720.0
  %v263 = vmul.f32 %v259, %v167
  %v264 = vmul.f32 %v260, %v168
  %v265 = vmul.f32 %v261, %v169
  %v266 = vmul.f32 %v262, %v170
  %v267 = vadd.f32 %v263, 0.0
  %v268 = vadd.f32 %v264, 0.0
  %v269 = vadd.f32 %v265, 0.0
  %v270 = vadd.f32 %v266, 0.0
  %v271 = vadd.f32 %v167, 0.5
  %v272 = vadd.f32 %v168, 0.5
  %v273 = vadd.f32 %v169, 0.5
  %v274 = vadd.f32 %v170, 0.5
  %v275 = vlog2.pop %v171
  %v276 = vmul.f32 %v275, 0.6931472
  %v277 = vlog2.pop %v172
  %v278 = vmul.f32 %v277, 0.6931472
  %v279 = vlog2.pop %v173
  %v280 = vmul.f32 %v279, 0.6931472
  %v281 = vlog2.pop %v174
  %v282 = vmul.f32 %v281, 0.6931472
  %v283 = vmul.f32 %v271, %v276
  %v284 = vmul.f32 %v272, %v278
  %v285 = vmul.f32 %v273, %v280
  %v286 = vmul.f32 %v274, %v282
  %v287 = vsub.f32 %v283, %v171
  %v288 = vsub.f32 %v284, %v172
  %v289 = vsub.f32 %v285, %v173
  %v290 = vsub.f32 %v286, %v174
  %v291 = vmul.f32 %v215, 2.5066283
  %v292 = vmul.f32 %v216, 2.5066283
  %v293 = vmul.f32 %v217, 2.5066283
  %v294 = vmul.f32 %v218, 2.5066283
  %v295 = vrcp.pop %v267
  %v296 = vmul.f32 %v291, %v295
  %v297 = vrcp.pop %v268
  %v298 = vmul.f32 %v292, %v297
  %v299 = vrcp.pop %v269
  %v300 = vmul.f32 %v293, %v299
  %v301 = vrcp.pop %v270
  %v302 = vmul.f32 %v294, %v301
  %v303 = vlog2.pop %v296
  %v304 = vmul.f32 %v303, 0.6931472
  %v305 = vlog2.pop %v298
  %v306 = vmul.f32 %v305, 0.6931472
  %v307 = vlog2.pop %v300
  %v308 = vmul.f32 %v307, 0.6931472
  %v309 = vlog2.pop %v302
  %v310 = vmul.f32 %v309, 0.6931472
  %v311 = vadd.f32 %v287, %v304
  %v312 = vadd.f32 %v288, %v306
  %v313 = vadd.f32 %v289, %v308
  %v314 = vadd.f32 %v290, %v310
  %v315 = vadd.f32 %v163, %v311
  %v316 = vadd.f32 %v164, %v312
  %v317 = vadd.f32 %v165, %v313
  %v318 = vadd.f32 %v166, %v314
  %v319 = vadd.f32 %v110, 5.5
  %v320 = vadd.f32 %v111, 5.5
  %v321 = vadd.f32 %v112, 5.5
  %v322 = vadd.f32 %v113, 5.5
  %v323 = vadd.f32 %v110, 33.458332
  %v324 = vadd.f32 %v111, 33.458332
  %v325 = vadd.f32 %v112, 33.458332
  %v326 = vadd.f32 %v113, 33.458332
  %v327 = vmul.f32 %v323, %v110
  %v328 = vmul.f32 %v324, %v111
  %v329 = vmul.f32 %v325, %v112
  %v330 = vmul.f32 %v326, %v113
  %v331 = vadd.f32 %v327, 466.3342
  %v332 = vadd.f32 %v328, 466.3342
  %v333 = vadd.f32 %v329, 466.3342
  %v334 = vadd.f32 %v330, 466.3342
  %v335 = vmul.f32 %v331, %v110
  %v336 = vmul.f32 %v332, %v111
  %v337 = vmul.f32 %v333, %v112
  %v338 = vmul.f32 %v334, %v113
  %v339 = vadd.f32 %v335, 3465.7095
  %v340 = vadd.f32 %v336, 3465.7095
  %v341 = vadd.f32 %v337, 3465.7095
  %v342 = vadd.f32 %v338, 3465.7095
  %v343 = vmul.f32 %v339, %v110
  %v344 = vmul.f32 %v340, %v111
  %v345 = vmul.f32 %v341, %v112
  %v346 = vmul.f32 %v342, %v113
  %v347 = vadd.f32 %v343, 14484.914
  %v348 = vadd.f32 %v344, 14484.914
  %v349 = vadd.f32 %v345, 14484.914
  %v350 = vadd.f32 %v346, 14484.914
  %v351 = vmul.f32 %v347, %v110
  %v352 = vmul.f32 %v348, %v111
  %v353 = vmul.f32 %v349, %v112
  %v354 = vmul.f32 %v350, %v113
  %v355 = vadd.f32 %v351, 32281.064
  %v356 = vadd.f32 %v352, 32281.064
  %v357 = vadd.f32 %v353, 32281.064
  %v358 = vadd.f32 %v354, 32281.064
  %v359 = vmul.f32 %v355, %v110
  %v360 = vmul.f32 %v356, %v111
  %v361 = vmul.f32 %v357, %v112
  %v362 = vmul.f32 %v358, %v113
  %v363 = vadd.f32 %v359, 29969.594
  %v364 = vadd.f32 %v360, 29969.594
  %v365 = vadd.f32 %v361, 29969.594
  %v366 = vadd.f32 %v362, 29969.594
  %v367 = vadd.f32 %v110, 21.0
  %v368 = vadd.f32 %v111, 21.0
  %v369 = vadd.f32 %v112, 21.0
  %v370 = vadd.f32 %v113, 21.0
  %v371 = vmul.f32 %v367, %v110
  %v372 = vmul.f32 %v368, %v111
  %v373 = vmul.f32 %v369, %v112
  %v374 = vmul.f32 %v370, %v113
  %v375 = vadd.f32 %v371, 175.0
  %v376 = vadd.f32 %v372, 175.0
  %v377 = vadd.f32 %v373, 175.0
  %v378 = vadd.f32 %v374, 175.0
  %v379 = vmul.f32 %v375, %v110
  %v380 = vmul.f32 %v376, %v111
  %v381 = vmul.f32 %v377, %v112
  %v382 = vmul.f32 %v378, %v113
  %v383 = vadd.f32 %v379, 735.0
  %v384 = vadd.f32 %v380, 735.0
  %v385 = vadd.f32 %v381, 735.0
  %v386 = vadd.f32 %v382, 735.0
  %v387 = vmul.f32 %v383, %v110
  %v388 = vmul.f32 %v384, %v111
  %v389 = vmul.f32 %v385, %v112
  %v390 = vmul.f32 %v386, %v113
  %v391 = vadd.f32 %v387, 1624.0
  %v392 = vadd.f32 %v388, 1624.0
  %v393 = vadd.f32 %v389, 1624.0
  %v394 = vadd.f32 %v390, 1624.0
  %v395 = vmul.f32 %v391, %v110
  %v396 = vmul.f32 %v392, %v111
  %v397 = vmul.f32 %v393, %v112
  %v398 = vmul.f32 %v394, %v113
  %v399 = vadd.f32 %v395, 1764.0
  %v400 = vadd.f32 %v396, 1764.0
  %v401 = vadd.f32 %v397, 1764.0
  %v402 = vadd.f32 %v398, 1764.0
  %v403 = vmul.f32 %v399, %v110
  %v404 = vmul.f32 %v400, %v111
  %v405 = vmul.f32 %v401, %v112
  %v406 = vmul.f32 %v402, %v113
  %v407 = vadd.f32 %v403, 720.0
  %v408 = vadd.f32 %v404, 720.0
  %v409 = vadd.f32 %v405, 720.0
  %v410 = vadd.f32 %v406, 720.0
  %v411 = vmul.f32 %v407, %v110
  %v412 = vmul.f32 %v408, %v111
  %v413 = vmul.f32 %v409, %v112
  %v414 = vmul.f32 %v410, %v113
  %v415 = vadd.f32 %v411, 0.0
  %v416 = vadd.f32 %v412, 0.0
  %v417 = vadd.f32 %v413, 0.0
  %v418 = vadd.f32 %v414, 0.0
  %v419 = vadd.f32 %v110, 0.5
  %v420 = vadd.f32 %v111, 0.5
  %v421 = vadd.f32 %v112, 0.5
  %v422 = vadd.f32 %v113, 0.5
  %v423 = vlog2.pop %v319
  %v424 = vmul.f32 %v423, 0.6931472
  %v425 = vlog2.pop %v320
  %v426 = vmul.f32 %v425, 0.6931472
  %v427 = vlog2.pop %v321
  %v428 = vmul.f32 %v427, 0.6931472
  %v429 = vlog2.pop %v322
  %v430 = vmul.f32 %v429, 0.6931472
  %v431 = vmul.f32 %v419, %v424
  %v432 = vmul.f32 %v420, %v426
  %v433 = vmul.f32 %v421, %v428
  %v434 = vmul.f32 %v422, %v430
  %v435 = vsub.f32 %v431, %v319
  %v436 = vsub.f32 %v432, %v320
  %v437 = vsub.f32 %v433, %v321
  %v438 = vsub.f32 %v434, %v322
  %v439 = vmul.f32 %v363, 2.5066283
  %v440 = vmul.f32 %v364, 2.5066283
  %v441 = vmul.f32 %v365, 2.5066283
  %v442 = vmul.f32 %v366, 2.5066283
  %v443 = vrcp.pop %v415
  %v444 = vmul.f32 %v439, %v443
  %v445 = vrcp.pop %v416
  %v446 = vmul.f32 %v440, %v445
  %v447 = vrcp.pop %v417
  %v448 = vmul.f32 %v441, %v447
  %v449 = vrcp.pop %v418
  %v450 = vmul.f32 %v442, %v449
  %v451 = vlog2.pop %v444
  %v452 = vmul.f32 %v451, 0.6931472
  %v453 = vlog2.pop %v446
  %v454 = vmul.f32 %v453, 0.6931472
  %v455 = vlog2.pop %v448
  %v456 = vmul.f32 %v455, 0.6931472
  %v457 = vlog2.pop %v450
  %v458 = vmul.f32 %v457, 0.6931472
  %v459 = vadd.f32 %v435, %v452
  %v460 = vadd.f32 %v436, %v454
  %v461 = vadd.f32 %v437, %v456
  %v462 = vadd.f32 %v438, %v458
  %v463 = vsub.f32 %v315, %v459
  %v464 = vsub.f32 %v316, %v460
  %v465 = vsub.f32 %v317, %v461
  %v466 = vsub.f32 %v318, %v462
  %v467 = vadd.f32 %v463, %v465
  %v468 = vrot.slane %v467, 4
  %v469 = vadd.f32 %v467, %v468
  %v470 = vrot.slane %v469, 2
  %v471 = vadd.f32 %v469, %v470
  %v472 = vrot.slane %v471, 1
  %v473 = vadd.f32 %v471, %v472
  %v474 = vadd.f32 %v464, %v466
  %v475 = vrot.slane %v474, 4
  %v476 = vadd.f32 %v474, %v475
  %v477 = vrot.slane %v476, 2
  %v478 = vadd.f32 %v476, %v477
  %v479 = vrot.slane %v478, 1
  %v480 = vadd.f32 %v478, %v479
  %v483 = vcombine.low %v473, %v480
  %v485 = vunpack.c.l.s4 1966171168
  %v486 = vunpack.c.0.s8 %v485
  %v487 = vlaneseq
  %v488 = vshrl.u32 %v487, 7
  %v489 = vsub.s32 %v486, %v488
  %v490 = vrot.slane %v483, %v489
  %v492 = vunpack.c.l.s4 1966171168
  %v493 = vunpack.c.0.s8 %v492
  %v494 = vlaneseq
  %v495 = vshrl.u32 %v494, 7
  %v496 = vsub.s32 %v493, %v495
  %v497 = vrot.slane %v490, %v496
  %v499 = vlaneseq
  %vm500 = vcmp.ge.s32.totalorder %v499, 0
  %vm501 = vcmp.lt.s32.totalorder %v499, 256
  %vm502 = vmand %vm500, %vm501
  %503 = vst.msk [vmem:[%s4] sm:$0x3] %vm502, %v497
  // Predicated region
  $region18: #{st_model_forward.1} parent=0 // pred_check
    _
  $region19: #{st_model_forward.1} parent=0 // pred_check_branch
    %505 = sbr.rel (0) target = $region21
  $region20: #{st_model_forward.1} parent=0 // pred_region
    _
  $region21: #{st_model_forward.1} parent=0 // pred_fallthru
    _
  // Predicated region
  $region22: #{st_model_forward.1} parent=0 // pred_check
    _
  $region23: #{st_model_forward.1} parent=0 // pred_check_branch
    %507 = sbr.rel (0) target = $region25
  $region24: #{st_model_forward.1} parent=0 // pred_region
    _
  $region25: #{st_model_forward.1} parent=0 // pred_fallthru
    _

</llo_original>
